<compile_context>
chip_gen: v7x
topology: tpu7x:2x2x1
jax: 0.10.0
libtpu: 0.0.40
codegen_flags: <defaults>
</compile_context>

<pallas_src>
import numpy as np
import jax
import jax.numpy as jnp
from jax.experimental import pallas as pl
from jax.experimental.pallas import tpu as pltpu  # noqa: F401  (TPU backend)

# ----------------------------- module configuration ----------------------------
SEQ_LEN = 16
FEAT_DIM = 4
HIDDEN = (8, 16)          # hidden_layer_sizes
LATENT = 8
ENC_LAST = 32             # encoder_last_dense_dim
BATCH = 2

# Deconv chain: hidden[-1] -> reversed(hidden[:-1]) -> feat_dim
_CHANS = [HIDDEN[-1]] + list(reversed(HIDDEN[:-1])) + [FEAT_DIM]        # [16, 8, 4]
_L0 = ENC_LAST // HIDDEN[-1]                                            # 2
_LS = [_L0 * (2 ** i) for i in range(len(_CHANS))]                      # [2, 4, 8]
L_FINAL = _LS[-1]                                                       # 8

NCAT = ENC_LAST + FEAT_DIM            # 36  (merged z-matmul output width)
NOUT = SEQ_LEN * FEAT_DIM             # 64  (flattened output width)

M1_ROWS, M1_COLS = _LS[0] * _CHANS[0], _LS[1] * _CHANS[1]               # (32, 32)
M2_ROWS, M2_COLS = _LS[1] * _CHANS[1], _LS[2] * _CHANS[2]               # (32, 32)
FW_ROWS = L_FINAL * FEAT_DIM                                            # 32

# ------------------------- packed parameter slab layout -------------------------
SLAB_COLS = 128           # lane-dense width


def _align8(n):
    return (n + 7) & ~7


_r = 0
R_WCAT = _r; _r = _align8(_r + LATENT)        # [dw.T | lw1.T]   (8, 36)
R_BCAT = _r; _r = _align8(_r + 1)             # [db | lb1]       (1, 36)
R_LW2 = _r; _r = _align8(_r + FEAT_DIM)       # lw2.T @ rep      (4, 64)
R_LB2 = _r; _r = _align8(_r + 1)              # lb2 @ rep        (1, 64)
R_M1 = _r; _r = _align8(_r + M1_ROWS)         # deconv1 as dense (32, 32)
R_C1 = _r; _r = _align8(_r + 1)               # deconv1 bias row (1, 32)
R_M2 = _r; _r = _align8(_r + M2_ROWS)         # deconv2 as dense (32, 32)
R_C2 = _r; _r = _align8(_r + 1)               # deconv2 bias row (1, 32)
R_FW = _r; _r = _align8(_r + FW_ROWS)         # final dense (permuted) (32, 64)
R_FB = _r; _r = _align8(_r + 1)               # final dense bias (1, 64)
SLAB_ROWS = _align8(_r)                       # 152


# ------------------------------ fused Pallas kernel -----------------------------
def _decoder_kernel(z_ref, slab_ref, o_ref):
    z = z_ref[...]

    # Merged dense(z): a = relu(z @ [dw.T | lw1.T] + [db | lb1])
    a = jnp.maximum(
        jnp.dot(z, slab_ref[R_WCAT:R_WCAT + LATENT, :NCAT],
                preferred_element_type=jnp.float32)
        + slab_ref[R_BCAT:R_BCAT + 1, :NCAT], 0.0)
    x = a[:, :ENC_LAST]                       # residual-branch activation (B, 32)
    h = a[:, ENC_LAST:NCAT]                   # level-branch activation    (B, 4)

    # ConvTranspose1d layers as precomputed dense GEMMs (+bias, +ReLU)
    x = jnp.maximum(
        jnp.dot(x, slab_ref[R_M1:R_M1 + M1_ROWS, :M1_COLS],
                preferred_element_type=jnp.float32)
        + slab_ref[R_C1:R_C1 + 1, :M1_COLS], 0.0)
    x = jnp.maximum(
        jnp.dot(x, slab_ref[R_M2:R_M2 + M2_ROWS, :M2_COLS],
                preferred_element_type=jnp.float32)
        + slab_ref[R_C2:R_C2 + 1, :M2_COLS], 0.0)

    # Final dense (columns pre-permuted to channels-last flatten order)
    resid = (jnp.dot(x, slab_ref[R_FW:R_FW + FW_ROWS, :NOUT],
                     preferred_element_type=jnp.float32)
             + slab_ref[R_FB:R_FB + 1, :NOUT])

    # Level branch with the sequence broadcast folded into the weights at prepare time
    level = (jnp.dot(h, slab_ref[R_LW2:R_LW2 + FEAT_DIM, :NOUT],
                     preferred_element_type=jnp.float32)
             + slab_ref[R_LB2:R_LB2 + 1, :NOUT])

    o_ref[...] = resid + level


def timevae_decoder_forward(z, slab):
    B = z.shape[0]
    out_flat = pl.pallas_call(
        _decoder_kernel,
        out_shape=jax.ShapeDtypeStruct((B, NOUT), jnp.float32),
    )(z, slab)
    # layout-only view in the jitted wrapper; kernel output stays lane-dense
    return out_flat.reshape(B, SEQ_LEN, FEAT_DIM)


# ------------------- parameter preparation (hoisted precompute) -----------------
def _deconv_as_dense(w, b, L):
    """ConvTranspose1d(k=3, s=2, p=1, op=1) on a channels-last flatten (idx l*C + c)
    as an exact dense (L*Cin, 2L*Cout) matrix + (2L*Cout,) bias row."""
    w = np.asarray(w, np.float32)
    b = np.asarray(b, np.float32)
    c_in, c_out, K = w.shape
    l_out = 2 * L
    M = np.zeros((L * c_in, l_out * c_out), np.float32)
    for l in range(L):
        for k in range(K):
            t = 2 * l - 1 + k
            if 0 <= t < l_out:
                M[l * c_in:(l + 1) * c_in, t * c_out:(t + 1) * c_out] = w[:, :, k]
    return M, np.tile(b, l_out)


def prepare_params(p):
    """Build the single kernel-ready parameter slab (all transposes / conv-as-GEMM /
    broadcast folding / column permutations done once, host-side)."""
    slab = np.zeros((SLAB_ROWS, SLAB_COLS), np.float32)

    # merged z-sided dense: [dw.T | lw1.T] and [db | lb1]
    slab[R_WCAT:R_WCAT + LATENT, :ENC_LAST] = np.asarray(p['dw'], np.float32).T
    slab[R_WCAT:R_WCAT + LATENT, ENC_LAST:NCAT] = np.asarray(p['lw1'], np.float32).T
    slab[R_BCAT, :ENC_LAST] = np.asarray(p['db'], np.float32)
    slab[R_BCAT, ENC_LAST:NCAT] = np.asarray(p['lb1'], np.float32)

    # level dense2 with the sequence broadcast folded in: rep[c, s*F + c] = 1
    rep = np.tile(np.eye(FEAT_DIM, dtype=np.float32), (1, SEQ_LEN))          # (4, 64)
    slab[R_LW2:R_LW2 + FEAT_DIM, :NOUT] = np.asarray(p['lw2'], np.float32).T @ rep
    slab[R_LB2, :NOUT] = np.asarray(p['lb2'], np.float32) @ rep

    # deconv chain as dense maps
    (w1, b1), (w2, b2) = p['deconvs']
    m1, c1 = _deconv_as_dense(w1, b1, _LS[0])
    m2, c2 = _deconv_as_dense(w2, b2, _LS[1])
    slab[R_M1:R_M1 + M1_ROWS, :M1_COLS] = m1
    slab[R_C1, :M1_COLS] = c1
    slab[R_M2:R_M2 + M2_ROWS, :M2_COLS] = m2
    slab[R_C2, :M2_COLS] = c2

    # final dense: permute torch's NCL flatten (c*Lf + l) -> channels-last (l*F + c)
    fw = np.asarray(p['fw'], np.float32)                                     # (64, 32)
    wg = fw.reshape(NOUT, FEAT_DIM, L_FINAL).transpose(2, 1, 0).reshape(FW_ROWS, NOUT)
    slab[R_FW:R_FW + FW_ROWS, :NOUT] = wg
    slab[R_FB, :NOUT] = np.asarray(p['fb'], np.float32)

    return jnp.asarray(slab)


# --------------------------- deterministic raw parameters -----------------------
def init_params(key):
    ks = jax.random.split(key, 16)
    p = {}
    p['lw1'] = 0.1 * jax.random.normal(ks[0], (FEAT_DIM, LATENT), jnp.float32)
    p['lb1'] = 0.1 * jax.random.normal(ks[1], (FEAT_DIM,), jnp.float32)
    p['lw2'] = 0.1 * jax.random.normal(ks[2], (FEAT_DIM, FEAT_DIM), jnp.float32)
    p['lb2'] = 0.1 * jax.random.normal(ks[3], (FEAT_DIM,), jnp.float32)
    p['dw'] = 0.1 * jax.random.normal(ks[4], (ENC_LAST, LATENT), jnp.float32)
    p['db'] = 0.1 * jax.random.normal(ks[5], (ENC_LAST,), jnp.float32)
    deconvs = []
    for i in range(len(_CHANS) - 1):
        c_in, c_out = _CHANS[i], _CHANS[i + 1]
        w = 0.1 * jax.random.normal(ks[6 + 2 * i], (c_in, c_out, 3), jnp.float32)
        b = 0.1 * jax.random.normal(ks[7 + 2 * i], (c_out,), jnp.float32)
        deconvs.append((w, b))
    p['deconvs'] = deconvs
    p['fw'] = 0.1 * jax.random.normal(ks[12], (SEQ_LEN * FEAT_DIM, FEAT_DIM * L_FINAL),
                                      jnp.float32)
    p['fb'] = 0.1 * jax.random.normal(ks[13], (SEQ_LEN * FEAT_DIM,), jnp.float32)
    return p


# ------------------------------ pure-JAX reference -------------------------------
def _convtranspose1d_ref(x, w, b):
    # x: (B, Cin, L), w: (Cin, Cout, 3); stride=2, padding=1, output_padding=1
    B, c_in, L = x.shape
    c_out, K = w.shape[1], w.shape[2]
    l_out = (L - 1) * 2 - 2 + K + 1
    y = jnp.zeros((B, c_out, l_out), jnp.float32)
    for l in range(L):
        for k in range(K):
            t = 2 * l - 1 + k
            if 0 <= t < l_out:
                y = y.at[:, :, t].add(x[:, :, l] @ w[:, :, k])
    return y + b[None, :, None]


def ref_forward(z, p):
    B = z.shape[0]
    h = jnp.maximum(z @ p['lw1'].T + p['lb1'], 0.0)
    lvl = h @ p['lw2'].T + p['lb2']
    level_vals = lvl.reshape(B, 1, FEAT_DIM) * jnp.ones((1, SEQ_LEN, 1), jnp.float32)
    x = jnp.maximum(z @ p['dw'].T + p['db'], 0.0)
    x = x.reshape(B, -1, HIDDEN[-1]).transpose(0, 2, 1)
    for (w, b) in p['deconvs']:
        x = jnp.maximum(_convtranspose1d_ref(x, w, b), 0.0)
    x = x.reshape(B, -1)
    resid = (x @ p['fw'].T + p['fb']).reshape(B, SEQ_LEN, FEAT_DIM)
    return level_vals + resid


# -------------------------------------- main -------------------------------------
if __name__ == "__main__":
    key = jax.random.PRNGKey(0)
    k_z, k_p = jax.random.split(key)
    z = jax.random.normal(k_z, (BATCH, LATENT), jnp.float32)
    raw = init_params(k_p)
    slab = prepare_params(raw)

    fwd = jax.jit(timevae_decoder_forward)
    out = fwd(z, slab)
    out = jax.block_until_ready(out)

    ref = ref_forward(z, raw)
    np.testing.assert_allclose(np.asarray(out), np.asarray(ref), rtol=1e-4, atol=1e-4)
    print("KERNEL_OK")
</pallas_src>

<mosaic_0001>
module attributes {stable_mosaic.version = 11 : i64} {
  func.func @_decoder_kernel(%arg0: memref<2x8xf32, #tpu.memory_space<vmem>>, %arg1: memref<152x128xf32, #tpu.memory_space<vmem>>, %arg2: memref<2x64xf32, #tpu.memory_space<vmem>>) attributes {dimension_semantics = [], scalar_prefetch = 0 : i64, scratch_operands = 0 : i64, tpu.core_type = #tpu.core_type<tc>} {
    %c0 = arith.constant 0 : index
    %c0_0 = arith.constant 0 : index
    %0 = vector.load %arg0[%c0, %c0_0] : memref<2x8xf32, #tpu.memory_space<vmem>>, vector<2x8xf32>
    %c0_1 = arith.constant 0 : index
    %c0_2 = arith.constant 0 : index
    %1 = vector.load %arg1[%c0_1, %c0_2] : memref<152x128xf32, #tpu.memory_space<vmem>>, vector<8x36xf32>
    %cst = arith.constant dense<0.000000e+00> : vector<2x36xf32>
    %2 = tpu.matmul %0, %1, %cst {dimension_numbers = #tpu.dot_dimension_numbers<[1], [0], [0], [1], [0, 0, 1, 1], [], []>} : vector<2x8xf32>, vector<8x36xf32>, vector<2x36xf32> -> vector<2x36xf32>
    %c8 = arith.constant 8 : index
    %c0_3 = arith.constant 0 : index
    %3 = vector.load %arg1[%c8, %c0_3] : memref<152x128xf32, #tpu.memory_space<vmem>>, vector<1x36xf32>
    %4 = vector.broadcast %3 : vector<1x36xf32> to vector<2x36xf32>
    %5 = arith.addf %2, %4 : vector<2x36xf32>
    %cst_4 = arith.constant 0.000000e+00 : f32
    %6 = vector.broadcast %cst_4 : f32 to vector<2x36xf32>
    %7 = arith.maximumf %5, %6 : vector<2x36xf32>
    %8 = vector.extract_strided_slice %7 {offsets = [0, 0], sizes = [2, 32], strides = [1, 1]} : vector<2x36xf32> to vector<2x32xf32>
    %9 = vector.extract_strided_slice %7 {offsets = [0, 32], sizes = [2, 4], strides = [1, 1]} : vector<2x36xf32> to vector<2x4xf32>
    %c32 = arith.constant 32 : index
    %c0_5 = arith.constant 0 : index
    %10 = vector.load %arg1[%c32, %c0_5] : memref<152x128xf32, #tpu.memory_space<vmem>>, vector<32x32xf32>
    %cst_6 = arith.constant dense<0.000000e+00> : vector<2x32xf32>
    %11 = tpu.matmul %8, %10, %cst_6 {dimension_numbers = #tpu.dot_dimension_numbers<[1], [0], [0], [1], [0, 0, 1, 1], [], []>} : vector<2x32xf32>, vector<32x32xf32>, vector<2x32xf32> -> vector<2x32xf32>
    %c64 = arith.constant 64 : index
    %c0_7 = arith.constant 0 : index
    %12 = vector.load %arg1[%c64, %c0_7] : memref<152x128xf32, #tpu.memory_space<vmem>>, vector<1x32xf32>
    %13 = vector.broadcast %12 : vector<1x32xf32> to vector<2x32xf32>
    %14 = arith.addf %11, %13 : vector<2x32xf32>
    %cst_8 = arith.constant 0.000000e+00 : f32
    %15 = vector.broadcast %cst_8 : f32 to vector<2x32xf32>
    %16 = arith.maximumf %14, %15 : vector<2x32xf32>
    %c72 = arith.constant 72 : index
    %c0_9 = arith.constant 0 : index
    %17 = vector.load %arg1[%c72, %c0_9] : memref<152x128xf32, #tpu.memory_space<vmem>>, vector<32x32xf32>
    %cst_10 = arith.constant dense<0.000000e+00> : vector<2x32xf32>
    %18 = tpu.matmul %16, %17, %cst_10 {dimension_numbers = #tpu.dot_dimension_numbers<[1], [0], [0], [1], [0, 0, 1, 1], [], []>} : vector<2x32xf32>, vector<32x32xf32>, vector<2x32xf32> -> vector<2x32xf32>
    %c104 = arith.constant 104 : index
    %c0_11 = arith.constant 0 : index
    %19 = vector.load %arg1[%c104, %c0_11] : memref<152x128xf32, #tpu.memory_space<vmem>>, vector<1x32xf32>
    %20 = vector.broadcast %19 : vector<1x32xf32> to vector<2x32xf32>
    %21 = arith.addf %18, %20 : vector<2x32xf32>
    %cst_12 = arith.constant 0.000000e+00 : f32
    %22 = vector.broadcast %cst_12 : f32 to vector<2x32xf32>
    %23 = arith.maximumf %21, %22 : vector<2x32xf32>
    %c112 = arith.constant 112 : index
    %c0_13 = arith.constant 0 : index
    %24 = vector.load %arg1[%c112, %c0_13] : memref<152x128xf32, #tpu.memory_space<vmem>>, vector<32x64xf32>
    %cst_14 = arith.constant dense<0.000000e+00> : vector<2x64xf32>
    %25 = tpu.matmul %23, %24, %cst_14 {dimension_numbers = #tpu.dot_dimension_numbers<[1], [0], [0], [1], [0, 0, 1, 1], [], []>} : vector<2x32xf32>, vector<32x64xf32>, vector<2x64xf32> -> vector<2x64xf32>
    %c144 = arith.constant 144 : index
    %c0_15 = arith.constant 0 : index
    %26 = vector.load %arg1[%c144, %c0_15] : memref<152x128xf32, #tpu.memory_space<vmem>>, vector<1x64xf32>
    %27 = vector.broadcast %26 : vector<1x64xf32> to vector<2x64xf32>
    %28 = arith.addf %25, %27 : vector<2x64xf32>
    %c16 = arith.constant 16 : index
    %c0_16 = arith.constant 0 : index
    %29 = vector.load %arg1[%c16, %c0_16] : memref<152x128xf32, #tpu.memory_space<vmem>>, vector<4x64xf32>
    %cst_17 = arith.constant dense<0.000000e+00> : vector<2x64xf32>
    %30 = tpu.matmul %9, %29, %cst_17 {dimension_numbers = #tpu.dot_dimension_numbers<[1], [0], [0], [1], [0, 0, 1, 1], [], []>} : vector<2x4xf32>, vector<4x64xf32>, vector<2x64xf32> -> vector<2x64xf32>
    %c24 = arith.constant 24 : index
    %c0_18 = arith.constant 0 : index
    %31 = vector.load %arg1[%c24, %c0_18] : memref<152x128xf32, #tpu.memory_space<vmem>>, vector<1x64xf32>
    %32 = vector.broadcast %31 : vector<1x64xf32> to vector<2x64xf32>
    %33 = arith.addf %30, %32 : vector<2x64xf32>
    %34 = arith.addf %28, %33 : vector<2x64xf32>
    %c0_19 = arith.constant 0 : index
    %c0_20 = arith.constant 0 : index
    %35 = vector.load %arg2[%c0_19, %c0_20] : memref<2x64xf32, #tpu.memory_space<vmem>>, vector<2x64xf32>
    tpu.vector_store %arg2[%c0_19, %c0_20], %34 {strides = array<i32>} : memref<2x64xf32, #tpu.memory_space<vmem>>, vector<2x64xf32>,
    return
  }
}

</mosaic_0001>

<llo_original>
// kernel: timevae_decoder_forward.1
$region0: #{timevae_decoder_forward.1}
  #allocation0 [shape = 'u32[]', space=smem, size = 0x4, offset = 0x4, fixed_abs, tag = 'smem constant byte address 0x4 - core index']
  #allocation1 [shape = 'u32[144,128]{1,0:T(1,128)}', space=vmem, size = 0x12000, scoped, tag = 'internal scratch']
  %s0 = inlined_call_operand.hbm [shape: f32[2,8], index: 0, kind: input, shape index: {}]
  %s1 = inlined_call_operand.hbm [shape: f32[152,128], index: 1, kind: input, shape index: {}]
  %s2 = inlined_call_operand.vmem [shape: f32[2,64], index: 2, kind: output, shape index: {}]
  %s3 = sld [smem:[#allocation0]]
  $region26: #{timevae_decoder_forward.1} parent=0
    _
  %s5 = ssub.s32 1, %s3
  %s6 = scalar_select 0, %s5, %s3
  $region1: #{timevae_decoder_forward.1} parent=0
    #allocation2 [shape = 'u8[1024]{0}', space=vmem, size = 0x400, scoped, tag = 'input window, operand 0, single buffered']
    #allocation3 [shape = 's32[1]{0}', space=sflag, size = 0x4, scoped, tag = 'scoped memory for timevae_decoder_forward.1']
    #allocation4 [shape = 'u8[77824]{0}', space=vmem, size = 0x13000, scoped, tag = 'input window, operand 1, single buffered']
    #allocation5 [shape = 's32[1]{0}', space=sflag, size = 0x4, scoped, tag = 'scoped memory for timevae_decoder_forward.1']
    %7 = vsyncpa [#allocation3], 0
    %8 = vsyncpa [#allocation5], 0
    // Predicated region
    $region2: #{timevae_decoder_forward.1} parent=1 // pred_check
      _
    $region3: #{timevae_decoder_forward.1} parent=1 // pred_check_branch
      %10 = sbr.rel (0) target = $region5
    $region4: #{timevae_decoder_forward.1} parent=1 // pred_region
      %s12 = ssub.s32 32, 32
      %13 = vsyncadd [#allocation3], %s12
      %s15 = sshll.u32 [#allocation2], 4
      %s16 = int_to_ptr.vmem [resolvable:$true] %s15
      %18 = dma.hbm_to_vmem [thread:$0]  %s0, 32, %s16, [#allocation3]
    $region5: #{timevae_decoder_forward.1} parent=1 // pred_fallthru
      _
    // Predicated region
    $region6: #{timevae_decoder_forward.1} parent=1 // pred_check
      _
    $region7: #{timevae_decoder_forward.1} parent=1 // pred_check_branch
      %20 = sbr.rel (0) target = $region9
    $region8: #{timevae_decoder_forward.1} parent=1 // pred_region
      %s22 = ssub.s32 2432, 2432
      %23 = vsyncadd [#allocation5], %s22
      %s24 = sshll.u32 [#allocation4], 4
      %s25 = int_to_ptr.vmem [resolvable:$true] %s24
      %30 = dma.hbm_to_vmem [thread:$0]  %s1, 2432, %s25, [#allocation5], 128, 128, 8
    $region9: #{timevae_decoder_forward.1} parent=1 // pred_fallthru
      _
    // Predicated region
    $region10: #{timevae_decoder_forward.1} parent=1 // pred_check
      _
    $region11: #{timevae_decoder_forward.1} parent=1 // pred_check_branch
      %32 = sbr.rel (0) target = $region13
    $region12: #{timevae_decoder_forward.1} parent=1 // pred_region
      %33 = dma.done [#allocation3], 32
    $region13: #{timevae_decoder_forward.1} parent=1 // pred_fallthru
      _
    // Predicated region
    $region14: #{timevae_decoder_forward.1} parent=1 // pred_check
      _
    $region15: #{timevae_decoder_forward.1} parent=1 // pred_check_branch
      %35 = sbr.rel (0) target = $region17
    $region16: #{timevae_decoder_forward.1} parent=1 // pred_region
      %36 = dma.done [#allocation5], 2432
    $region17: #{timevae_decoder_forward.1} parent=1 // pred_fallthru
      _
    %v37 = vld [vmem:[#allocation2] sm:$0x3]
    %v38 = vld [vmem:[#allocation4] sm:$0xff]
    %v39 = vld [vmem:[#allocation4 + $0x8] sm:$0x1]
    %v40 = vlaneseq
    %v41 = vshrl.u32 %v40, 7
    %v42 = vsub.s32 0, %v41
    %v43 = vrot.slane %v39, %v42
    %vm44 = vcmask 64512
    %v46 = vsel %vm44, %v37, 0
    %48 = vmatprep.subr.mxu0 0.0
    %49 = vmatpush1.msra.mxu0 %v38
    %50 = vmatprep.subr.mxu0 0.0
    %51 = vmatpush1.msra.mxu0 0.0
    %52 = vmatprep.subr.mxu0 0.0
    %53 = vmatpush1.msra.mxu0 0.0
    %54 = vmatprep.subr.mxu0 0.0
    %55 = vmatpush1.msra.mxu0 0.0
    %56 = vmatprep.subr.mxu0 0.0
    %57 = vmatpush1.msra.mxu0 0.0
    %58 = vmatprep.subr.mxu0 0.0
    %59 = vmatpush1.msra.mxu0 0.0
    %60 = vmatprep.subr.mxu0 0.0
    %61 = vmatpush1.msra.mxu0 0.0
    %62 = vmatprep.subr.mxu0 0.0
    %63 = vmatpush1.msra.mxu0 0.0
    %64 = vmatprep.subr.mxu0 0.0
    %65 = vmatpush1.msra.mxu0 0.0
    %66 = vmatprep.subr.mxu0 0.0
    %67 = vmatpush1.msra.mxu0 0.0
    %68 = vmatprep.subr.mxu0 0.0
    %69 = vmatpush1.msra.mxu0 0.0
    %70 = vmatprep.subr.mxu0 0.0
    %71 = vmatpush1.msra.mxu0 0.0
    %72 = vmatprep.subr.mxu0 0.0
    %73 = vmatpush1.msra.mxu0 0.0
    %74 = vmatprep.subr.mxu0 0.0
    %75 = vmatpush1.msra.mxu0 0.0
    %76 = vmatprep.subr.mxu0 0.0
    %77 = vmatpush1.msra.mxu0 0.0
    %78 = vmatprep.subr.mxu0 0.0
    %79 = vmatpush1.msra.mxu0 0.0
    %80 = vmatprep.subr.mxu0 0.0
    %81 = vmatpush1.msra.mxu0 0.0
    %82 = vmatprep.subr.mxu0 0.0
    %83 = vmatpush1.msra.mxu0 0.0
    %84 = vmatprep.subr.mxu0 0.0
    %85 = vmatpush1.msra.mxu0 0.0
    %86 = vmatprep.subr.mxu0 0.0
    %87 = vmatpush1.msra.mxu0 0.0
    %88 = vmatprep.subr.mxu0 0.0
    %89 = vmatpush1.msra.mxu0 0.0
    %90 = vmatprep.subr.mxu0 0.0
    %91 = vmatpush1.msra.mxu0 0.0
    %92 = vmatprep.subr.mxu0 0.0
    %93 = vmatpush1.msra.mxu0 0.0
    %94 = vmatprep.subr.mxu0 0.0
    %95 = vmatpush1.msra.mxu0 0.0
    %96 = vmatprep.subr.mxu0 0.0
    %97 = vmatpush1.msra.mxu0 0.0
    %98 = vmatprep.subr.mxu0 0.0
    %99 = vmatpush1.msra.mxu0 0.0
    %100 = vmatprep.subr.mxu0 0.0
    %101 = vmatpush1.msra.mxu0 0.0
    %102 = vmatprep.subr.mxu0 0.0
    %103 = vmatpush1.msra.mxu0 0.0
    %104 = vmatprep.subr.mxu0 0.0
    %105 = vmatpush1.msra.mxu0 0.0
    %106 = vmatprep.subr.mxu0 0.0
    %107 = vmatpush1.msra.mxu0 0.0
    %108 = vmatprep.subr.mxu0 0.0
    %109 = vmatpush1.msra.mxu0 0.0
    %110 = vmatprep.subr.mxu0 0.0
    %111 = vmatpush1.msra.mxu0 0.0
    %112 = vmatprep.mubr.f32.mxu0 0.0
    %113 = vmatmul.mubr.f32.gmra.mrb[0].mxu0 %v46
    %v114 = vpop.f32.mrb[0].mxu0
    %v115 = vadd.f32 %v43, %v114
    %v116 = vpop.f32.mrb[0].mxu0
    %117 = vdwg.mxu0
    %v118 = vmax.f32 %v115, 0.0
    %v119 = vld [vmem:[#allocation4 + $0x20] sm:$0xff]
    %v120 = vld [vmem:[#allocation4 + $0x28] sm:$0xff]
    %v121 = vld [vmem:[#allocation4 + $0x30] sm:$0xff]
    %v122 = vld [vmem:[#allocation4 + $0x38] sm:$0xff]
    %v123 = vld [vmem:[#allocation4 + $0x40] sm:$0x1]
    %v124 = vlaneseq
    %v125 = vshrl.u32 %v124, 7
    %v126 = vsub.s32 0, %v125
    %v127 = vrot.slane %v123, %v126
    %vm128 = vcmask 261120
    %v130 = vsel %vm128, %v118, 0
    %132 = vmatprep.subr.mxu0 0.0
    %133 = vmatpush1.msra.mxu0 %v119
    %134 = vmatprep.subr.mxu0 0.0
    %135 = vmatpush1.msra.mxu0 %v120
    %136 = vmatprep.subr.mxu0 0.0
    %137 = vmatpush1.msra.mxu0 %v121
    %138 = vmatprep.subr.mxu0 0.0
    %139 = vmatpush1.msra.mxu0 %v122
    %140 = vmatprep.subr.mxu0 0.0
    %141 = vmatpush1.msra.mxu0 0.0
    %142 = vmatprep.subr.mxu0 0.0
    %143 = vmatpush1.msra.mxu0 0.0
    %144 = vmatprep.subr.mxu0 0.0
    %145 = vmatpush1.msra.mxu0 0.0
    %146 = vmatprep.subr.mxu0 0.0
    %147 = vmatpush1.msra.mxu0 0.0
    %148 = vmatprep.subr.mxu0 0.0
    %149 = vmatpush1.msra.mxu0 0.0
    %150 = vmatprep.subr.mxu0 0.0
    %151 = vmatpush1.msra.mxu0 0.0
    %152 = vmatprep.subr.mxu0 0.0
    %153 = vmatpush1.msra.mxu0 0.0
    %154 = vmatprep.subr.mxu0 0.0
    %155 = vmatpush1.msra.mxu0 0.0
    %156 = vmatprep.subr.mxu0 0.0
    %157 = vmatpush1.msra.mxu0 0.0
    %158 = vmatprep.subr.mxu0 0.0
    %159 = vmatpush1.msra.mxu0 0.0
    %160 = vmatprep.subr.mxu0 0.0
    %161 = vmatpush1.msra.mxu0 0.0
    %162 = vmatprep.subr.mxu0 0.0
    %163 = vmatpush1.msra.mxu0 0.0
    %164 = vmatprep.subr.mxu0 0.0
    %165 = vmatpush1.msra.mxu0 0.0
    %166 = vmatprep.subr.mxu0 0.0
    %167 = vmatpush1.msra.mxu0 0.0
    %168 = vmatprep.subr.mxu0 0.0
    %169 = vmatpush1.msra.mxu0 0.0
    %170 = vmatprep.subr.mxu0 0.0
    %171 = vmatpush1.msra.mxu0 0.0
    %172 = vmatprep.subr.mxu0 0.0
    %173 = vmatpush1.msra.mxu0 0.0
    %174 = vmatprep.subr.mxu0 0.0
    %175 = vmatpush1.msra.mxu0 0.0
    %176 = vmatprep.subr.mxu0 0.0
    %177 = vmatpush1.msra.mxu0 0.0
    %178 = vmatprep.subr.mxu0 0.0
    %179 = vmatpush1.msra.mxu0 0.0
    %180 = vmatprep.subr.mxu0 0.0
    %181 = vmatpush1.msra.mxu0 0.0
    %182 = vmatprep.subr.mxu0 0.0
    %183 = vmatpush1.msra.mxu0 0.0
    %184 = vmatprep.subr.mxu0 0.0
    %185 = vmatpush1.msra.mxu0 0.0
    %186 = vmatprep.subr.mxu0 0.0
    %187 = vmatpush1.msra.mxu0 0.0
    %188 = vmatprep.subr.mxu0 0.0
    %189 = vmatpush1.msra.mxu0 0.0
    %190 = vmatprep.subr.mxu0 0.0
    %191 = vmatpush1.msra.mxu0 0.0
    %192 = vmatprep.subr.mxu0 0.0
    %193 = vmatpush1.msra.mxu0 0.0
    %194 = vmatprep.subr.mxu0 0.0
    %195 = vmatpush1.msra.mxu0 0.0
    %196 = vmatprep.mubr.f32.mxu0 0.0
    %197 = vmatmul.mubr.f32.gmra.mrb[0].mxu0 %v130
    %v198 = vpop.f32.mrb[0].mxu0
    %v199 = vadd.f32 %v127, %v198
    %v200 = vpop.f32.mrb[0].mxu0
    %201 = vdwg.mxu0
    %v202 = vmax.f32 %v199, 0.0
    %v203 = vld [vmem:[#allocation4 + $0x48] sm:$0xff]
    %v204 = vld [vmem:[#allocation4 + $0x50] sm:$0xff]
    %v205 = vld [vmem:[#allocation4 + $0x58] sm:$0xff]
    %v206 = vld [vmem:[#allocation4 + $0x60] sm:$0xff]
    %v207 = vld [vmem:[#allocation4 + $0x68] sm:$0x1]
    %v208 = vlaneseq
    %v209 = vshrl.u32 %v208, 7
    %v210 = vsub.s32 0, %v209
    %v211 = vrot.slane %v207, %v210
    %v213 = vsel %vm128, %v202, 0
    %215 = vmatprep.subr.mxu0 0.0
    %216 = vmatpush1.msra.mxu0 %v203
    %217 = vmatprep.subr.mxu0 0.0
    %218 = vmatpush1.msra.mxu0 %v204
    %219 = vmatprep.subr.mxu0 0.0
    %220 = vmatpush1.msra.mxu0 %v205
    %221 = vmatprep.subr.mxu0 0.0
    %222 = vmatpush1.msra.mxu0 %v206
    %223 = vmatprep.subr.mxu0 0.0
    %224 = vmatpush1.msra.mxu0 0.0
    %225 = vmatprep.subr.mxu0 0.0
    %226 = vmatpush1.msra.mxu0 0.0
    %227 = vmatprep.subr.mxu0 0.0
    %228 = vmatpush1.msra.mxu0 0.0
    %229 = vmatprep.subr.mxu0 0.0
    %230 = vmatpush1.msra.mxu0 0.0
    %231 = vmatprep.subr.mxu0 0.0
    %232 = vmatpush1.msra.mxu0 0.0
    %233 = vmatprep.subr.mxu0 0.0
    %234 = vmatpush1.msra.mxu0 0.0
    %235 = vmatprep.subr.mxu0 0.0
    %236 = vmatpush1.msra.mxu0 0.0
    %237 = vmatprep.subr.mxu0 0.0
    %238 = vmatpush1.msra.mxu0 0.0
    %239 = vmatprep.subr.mxu0 0.0
    %240 = vmatpush1.msra.mxu0 0.0
    %241 = vmatprep.subr.mxu0 0.0
    %242 = vmatpush1.msra.mxu0 0.0
    %243 = vmatprep.subr.mxu0 0.0
    %244 = vmatpush1.msra.mxu0 0.0
    %245 = vmatprep.subr.mxu0 0.0
    %246 = vmatpush1.msra.mxu0 0.0
    %247 = vmatprep.subr.mxu0 0.0
    %248 = vmatpush1.msra.mxu0 0.0
    %249 = vmatprep.subr.mxu0 0.0
    %250 = vmatpush1.msra.mxu0 0.0
    %251 = vmatprep.subr.mxu0 0.0
    %252 = vmatpush1.msra.mxu0 0.0
    %253 = vmatprep.subr.mxu0 0.0
    %254 = vmatpush1.msra.mxu0 0.0
    %255 = vmatprep.subr.mxu0 0.0
    %256 = vmatpush1.msra.mxu0 0.0
    %257 = vmatprep.subr.mxu0 0.0
    %258 = vmatpush1.msra.mxu0 0.0
    %259 = vmatprep.subr.mxu0 0.0
    %260 = vmatpush1.msra.mxu0 0.0
    %261 = vmatprep.subr.mxu0 0.0
    %262 = vmatpush1.msra.mxu0 0.0
    %263 = vmatprep.subr.mxu0 0.0
    %264 = vmatpush1.msra.mxu0 0.0
    %265 = vmatprep.subr.mxu0 0.0
    %266 = vmatpush1.msra.mxu0 0.0
    %267 = vmatprep.subr.mxu0 0.0
    %268 = vmatpush1.msra.mxu0 0.0
    %269 = vmatprep.subr.mxu0 0.0
    %270 = vmatpush1.msra.mxu0 0.0
    %271 = vmatprep.subr.mxu0 0.0
    %272 = vmatpush1.msra.mxu0 0.0
    %273 = vmatprep.subr.mxu0 0.0
    %274 = vmatpush1.msra.mxu0 0.0
    %275 = vmatprep.subr.mxu0 0.0
    %276 = vmatpush1.msra.mxu0 0.0
    %277 = vmatprep.subr.mxu0 0.0
    %278 = vmatpush1.msra.mxu0 0.0
    %279 = vmatprep.mubr.f32.mxu0 0.0
    %280 = vmatmul.mubr.f32.gmra.mrb[0].mxu0 %v213
    %v281 = vpop.f32.mrb[0].mxu0
    %v282 = vadd.f32 %v211, %v281
    %v283 = vpop.f32.mrb[0].mxu0
    %284 = vdwg.mxu0
    %v285 = vmax.f32 %v282, 0.0
    %v286 = vld [vmem:[#allocation4 + $0x70] sm:$0xff]
    %v287 = vld [vmem:[#allocation4 + $0x78] sm:$0xff]
    %v288 = vld [vmem:[#allocation4 + $0x80] sm:$0xff]
    %v289 = vld [vmem:[#allocation4 + $0x88] sm:$0xff]
    %v290 = vld [vmem:[#allocation4 + $0x90] sm:$0x1]
    %v291 = vlaneseq
    %v292 = vshrl.u32 %v291, 7
    %v293 = vsub.s32 0, %v292
    %v294 = vrot.slane %v290, %v293
    %v296 = vsel %vm128, %v285, 0
    %298 = vmatprep.subr.mxu0 0.0
    %299 = vmatpush1.msra.mxu0 %v286
    %300 = vmatprep.subr.mxu0 0.0
    %301 = vmatpush1.msra.mxu0 %v287
    %302 = vmatprep.subr.mxu0 0.0
    %303 = vmatpush1.msra.mxu0 %v288
    %304 = vmatprep.subr.mxu0 0.0
    %305 = vmatpush1.msra.mxu0 %v289
    %306 = vmatprep.subr.mxu0 0.0
    %307 = vmatpush1.msra.mxu0 0.0
    %308 = vmatprep.subr.mxu0 0.0
    %309 = vmatpush1.msra.mxu0 0.0
    %310 = vmatprep.subr.mxu0 0.0
    %311 = vmatpush1.msra.mxu0 0.0
    %312 = vmatprep.subr.mxu0 0.0
    %313 = vmatpush1.msra.mxu0 0.0
    %314 = vmatprep.subr.mxu0 0.0
    %315 = vmatpush1.msra.mxu0 0.0
    %316 = vmatprep.subr.mxu0 0.0
    %317 = vmatpush1.msra.mxu0 0.0
    %318 = vmatprep.subr.mxu0 0.0
    %319 = vmatpush1.msra.mxu0 0.0
    %320 = vmatprep.subr.mxu0 0.0
    %321 = vmatpush1.msra.mxu0 0.0
    %322 = vmatprep.subr.mxu0 0.0
    %323 = vmatpush1.msra.mxu0 0.0
    %324 = vmatprep.subr.mxu0 0.0
    %325 = vmatpush1.msra.mxu0 0.0
    %326 = vmatprep.subr.mxu0 0.0
    %327 = vmatpush1.msra.mxu0 0.0
    %328 = vmatprep.subr.mxu0 0.0
    %329 = vmatpush1.msra.mxu0 0.0
    %330 = vmatprep.subr.mxu0 0.0
    %331 = vmatpush1.msra.mxu0 0.0
    %332 = vmatprep.subr.mxu0 0.0
    %333 = vmatpush1.msra.mxu0 0.0
    %334 = vmatprep.subr.mxu0 0.0
    %335 = vmatpush1.msra.mxu0 0.0
    %336 = vmatprep.subr.mxu0 0.0
    %337 = vmatpush1.msra.mxu0 0.0
    %338 = vmatprep.subr.mxu0 0.0
    %339 = vmatpush1.msra.mxu0 0.0
    %340 = vmatprep.subr.mxu0 0.0
    %341 = vmatpush1.msra.mxu0 0.0
    %342 = vmatprep.subr.mxu0 0.0
    %343 = vmatpush1.msra.mxu0 0.0
    %344 = vmatprep.subr.mxu0 0.0
    %345 = vmatpush1.msra.mxu0 0.0
    %346 = vmatprep.subr.mxu0 0.0
    %347 = vmatpush1.msra.mxu0 0.0
    %348 = vmatprep.subr.mxu0 0.0
    %349 = vmatpush1.msra.mxu0 0.0
    %350 = vmatprep.subr.mxu0 0.0
    %351 = vmatpush1.msra.mxu0 0.0
    %352 = vmatprep.subr.mxu0 0.0
    %353 = vmatpush1.msra.mxu0 0.0
    %354 = vmatprep.subr.mxu0 0.0
    %355 = vmatpush1.msra.mxu0 0.0
    %356 = vmatprep.subr.mxu0 0.0
    %357 = vmatpush1.msra.mxu0 0.0
    %358 = vmatprep.subr.mxu0 0.0
    %359 = vmatpush1.msra.mxu0 0.0
    %360 = vmatprep.subr.mxu0 0.0
    %361 = vmatpush1.msra.mxu0 0.0
    %362 = vmatprep.mubr.f32.mxu0 0.0
    %363 = vmatmul.mubr.f32.gmra.mrb[0].mxu0 %v296
    %v364 = vpop.f32.mrb[0].mxu0
    %v365 = vadd.f32 %v294, %v364
    %v366 = vpop.f32.mrb[0].mxu0
    %367 = vdwg.mxu0
    %v368 = vld [vmem:[#allocation4 + $0x10] sm:$0xf]
    %v369 = vld [vmem:[#allocation4 + $0x18] sm:$0x1]
    %v370 = vlaneseq
    %v371 = vshrl.u32 %v370, 7
    %v372 = vsub.s32 0, %v371
    %v373 = vrot.slane %v369, %v372
    %374 = vrot.lane.b32.xlu0 %v118, 96
    %v375 = vpop.permute.xlu0 %374
    %vm376 = vcmask 31744
    %v377 = vsel %vm376, %v375, 0
    %vm379 = vcmask 1043456
    %v381 = vsel %vm379, %v368, 0
    %383 = vmatprep.subr.mxu0 0.0
    %384 = vmatpush1.msra.mxu0 %v381
    %385 = vmatprep.subr.mxu0 0.0
    %386 = vmatpush1.msra.mxu0 0.0
    %387 = vmatprep.subr.mxu0 0.0
    %388 = vmatpush1.msra.mxu0 0.0
    %389 = vmatprep.subr.mxu0 0.0
    %390 = vmatpush1.msra.mxu0 0.0
    %391 = vmatprep.subr.mxu0 0.0
    %392 = vmatpush1.msra.mxu0 0.0
    %393 = vmatprep.subr.mxu0 0.0
    %394 = vmatpush1.msra.mxu0 0.0
    %395 = vmatprep.subr.mxu0 0.0
    %396 = vmatpush1.msra.mxu0 0.0
    %397 = vmatprep.subr.mxu0 0.0
    %398 = vmatpush1.msra.mxu0 0.0
    %399 = vmatprep.subr.mxu0 0.0
    %400 = vmatpush1.msra.mxu0 0.0
    %401 = vmatprep.subr.mxu0 0.0
    %402 = vmatpush1.msra.mxu0 0.0
    %403 = vmatprep.subr.mxu0 0.0
    %404 = vmatpush1.msra.mxu0 0.0
    %405 = vmatprep.subr.mxu0 0.0
    %406 = vmatpush1.msra.mxu0 0.0
    %407 = vmatprep.subr.mxu0 0.0
    %408 = vmatpush1.msra.mxu0 0.0
    %409 = vmatprep.subr.mxu0 0.0
    %410 = vmatpush1.msra.mxu0 0.0
    %411 = vmatprep.subr.mxu0 0.0
    %412 = vmatpush1.msra.mxu0 0.0
    %413 = vmatprep.subr.mxu0 0.0
    %414 = vmatpush1.msra.mxu0 0.0
    %415 = vmatprep.subr.mxu0 0.0
    %416 = vmatpush1.msra.mxu0 0.0
    %417 = vmatprep.subr.mxu0 0.0
    %418 = vmatpush1.msra.mxu0 0.0
    %419 = vmatprep.subr.mxu0 0.0
    %420 = vmatpush1.msra.mxu0 0.0
    %421 = vmatprep.subr.mxu0 0.0
    %422 = vmatpush1.msra.mxu0 0.0
    %423 = vmatprep.subr.mxu0 0.0
    %424 = vmatpush1.msra.mxu0 0.0
    %425 = vmatprep.subr.mxu0 0.0
    %426 = vmatpush1.msra.mxu0 0.0
    %427 = vmatprep.subr.mxu0 0.0
    %428 = vmatpush1.msra.mxu0 0.0
    %429 = vmatprep.subr.mxu0 0.0
    %430 = vmatpush1.msra.mxu0 0.0
    %431 = vmatprep.subr.mxu0 0.0
    %432 = vmatpush1.msra.mxu0 0.0
    %433 = vmatprep.subr.mxu0 0.0
    %434 = vmatpush1.msra.mxu0 0.0
    %435 = vmatprep.subr.mxu0 0.0
    %436 = vmatpush1.msra.mxu0 0.0
    %437 = vmatprep.subr.mxu0 0.0
    %438 = vmatpush1.msra.mxu0 0.0
    %439 = vmatprep.subr.mxu0 0.0
    %440 = vmatpush1.msra.mxu0 0.0
    %441 = vmatprep.subr.mxu0 0.0
    %442 = vmatpush1.msra.mxu0 0.0
    %443 = vmatprep.subr.mxu0 0.0
    %444 = vmatpush1.msra.mxu0 0.0
    %445 = vmatprep.subr.mxu0 0.0
    %446 = vmatpush1.msra.mxu0 0.0
    %447 = vmatprep.mubr.f32.mxu0 0.0
    %448 = vmatmul.mubr.f32.gmra.mrb[0].mxu0 %v377
    %v449 = vpop.f32.mrb[0].mxu0
    %v450 = vadd.f32 %v373, %v449
    %v451 = vpop.f32.mrb[0].mxu0
    %452 = vdwg.mxu0
    %v453 = vadd.f32 %v365, %v450
    %vm454 = vcmask 517120
    %455 = vst.msk [vmem:[%s2] sm:$0x3] %vm454, %v453
    // Predicated region
    $region18: #{timevae_decoder_forward.1} parent=1 // pred_check
      _
    $region19: #{timevae_decoder_forward.1} parent=1 // pred_check_branch
      %457 = sbr.rel (0) target = $region21
    $region20: #{timevae_decoder_forward.1} parent=1 // pred_region
      _
    $region21: #{timevae_decoder_forward.1} parent=1 // pred_fallthru
      _
    // Predicated region
    $region22: #{timevae_decoder_forward.1} parent=1 // pred_check
      _
    $region23: #{timevae_decoder_forward.1} parent=1 // pred_check_branch
      %459 = sbr.rel (0) target = $region25
    $region24: #{timevae_decoder_forward.1} parent=1 // pred_region
      _
    $region25: #{timevae_decoder_forward.1} parent=1 // pred_fallthru
      _
    %460 = vsyncpa [#allocation3], 1
    %461 = vsyncpa [#allocation5], 1

</llo_original>
